<compile_context>
chip_gen: v6e
topology: v6e:2x2x1
jax: 0.10.0
libtpu: 0.0.40
codegen_flags: <defaults>
</compile_context>

<pallas_src>
import functools

import jax
import jax.numpy as jnp
from jax import lax
from jax.experimental import pallas as pl
from jax.experimental.pallas import tpu as pltpu

LN_EPS = 1e-5


def _cdiv(a, b):
    return -(-a // b)


def _round_up(v, m):
    return ((v + m - 1) // m) * m


def _feature_projection_kernel(x_ref, w_ref, b_ref, o_ref, *,
                               inv_n, n_real, mask_k, eps):
    # x_ref: (tm, Kp)  rows x (maybe padded) input features
    # w_ref: (Kp, tn)  folded weight tile (gamma already absorbed)
    # b_ref: (1, tn)   folded bias tile (beta @ W + b), f32
    # o_ref: (tm, tn)
    x = x_ref[...].astype(jnp.float32)

    # Two-pass LayerNorm statistics in f32 (matches torch.nn.LayerNorm,
    # avoids E[x^2]-mu^2 cancellation).
    mu = jnp.sum(x, axis=-1, keepdims=True) * inv_n
    d = x - mu
    if mask_k:
        # Zero the padded feature columns so they don't contribute to var.
        col = lax.broadcasted_iota(jnp.int32, d.shape, 1)
        d = jnp.where(col < n_real, d, 0.0)
    var = jnp.sum(d * d, axis=-1, keepdims=True) * inv_n
    xn = d * lax.rsqrt(var + eps)

    # Projection on the MXU in the weight's native dtype, f32 accumulation.
    y = xn.astype(w_ref.dtype)
    out = jnp.dot(y, w_ref[...], preferred_element_type=jnp.float32)
    out = out + b_ref[...]

    # Dropout: eval/inference mode -> identity.
    o_ref[...] = out.astype(o_ref.dtype)


def fold_feature_projection_params(gamma, beta, weight, bias):
    """Fold LayerNorm affine into the projection. Call ONCE at param-load time.

    `weight` is (in_features, out_features), i.e. nn.Linear weight transposed.
    Returns (w_folded, b_folded) with w_folded in weight.dtype, b_folded f32.
    Note: rounding gamma*W back to bf16 differs from scaling the normalized
    activations before a bf16 matmul only within bf16 rounding noise.
    """
    w32 = weight.astype(jnp.float32)
    w_folded = (gamma.astype(jnp.float32)[:, None] * w32).astype(weight.dtype)
    b_folded = beta.astype(jnp.float32) @ w32 + bias.astype(jnp.float32)
    return w_folded, b_folded


def feature_projection_folded(x, w_folded, b_folded, *, tm=1024):
    """x: (batch, num_frames, in_features) -> (batch, num_frames, out_features)."""
    batch, frames, in_features = x.shape
    k_dim, out_features = w_folded.shape
    assert k_dim == in_features
    M = batch * frames

    x2d = x.reshape(M, in_features)

    # --- K-axis pad only when in_features isn't lane aligned ----------------
    pad_k = (-in_features) % 128
    Kp = in_features + pad_k
    if pad_k:
        x2d = jnp.pad(x2d, ((0, 0), (0, pad_k)))
        w_in = jnp.pad(w_folded, ((0, pad_k), (0, 0)))
    else:
        w_in = w_folded
    b_in = b_folded.astype(jnp.float32).reshape(1, out_features)

    x_isz = jnp.dtype(x.dtype).itemsize
    w_isz = jnp.dtype(w_in.dtype).itemsize

    # --- Generation-aware VMEM budget ---------------------------------------
    try:
        vmem_cap = int(pltpu.get_tpu_info().vmem_capacity_bytes)
    except Exception:
        vmem_cap = 64 * (1 << 20)          # conservative (v7x per-TC) fallback
    vmem_budget = int(vmem_cap * 0.82)     # ~105 MiB on v5e/v6e, ~52 MiB on v7x

    # --- N tiling: resident weight if it fits ~1/3 of budget, else stream ---
    resident = (out_features <= 512
                or Kp * out_features * w_isz <= vmem_budget // 3)
    if resident:
        tn, n_tiles = out_features, 1
    else:
        cap_tn = ((vmem_budget // 3) // (2 * Kp * w_isz)) // 256 * 256
        tn = int(max(256, min(cap_tn, (out_features // 256) * 256)))
        n_tiles = _cdiv(out_features, tn)

    # --- Row tile: big (HBM-bound), but keep >= ~4 tiles for megacore -------
    tm_eff = max(16, min(tm, _round_up(_cdiv(M, 4), 16)))

    def est_bytes(tm_):
        w_nbuf = 1 if resident else 2          # Buffered(1) when resident
        return (w_nbuf * Kp * tn * w_isz       # weight buffer(s)
                + w_nbuf * tn * 4              # bias buffer(s)
                + 2 * tm_ * Kp * x_isz         # x double-buffer
                + 2 * tm_ * tn * x_isz         # out double-buffer
                + 2 * tm_ * Kp * 4             # f32 x and (x - mu) temporaries
                + tm_ * Kp * w_isz             # xn cast for the MXU
                + tm_ * tn * 4)                # f32 accumulator

    while tm_eff > 16 and est_bytes(tm_eff) > vmem_budget:
        tm_eff = max(16, _round_up(tm_eff // 2, 16))

    vmem_limit = int(min(vmem_budget,
                         max(2 * est_bytes(tm_eff), 32 * (1 << 20))))

    grid = (_cdiv(M, tm_eff), n_tiles)

    if resident:
        w_spec = pl.BlockSpec((Kp, tn), lambda i, j: (0, 0),
                              pipeline_mode=pl.Buffered(1))
        b_spec = pl.BlockSpec((1, tn), lambda i, j: (0, 0),
                              pipeline_mode=pl.Buffered(1))
    else:
        w_spec = pl.BlockSpec((Kp, tn), lambda i, j: (0, j))
        b_spec = pl.BlockSpec((1, tn), lambda i, j: (0, j))

    kernel = functools.partial(_feature_projection_kernel,
                               inv_n=1.0 / in_features,
                               n_real=in_features,
                               mask_k=bool(pad_k),
                               eps=LN_EPS)

    out2d = pl.pallas_call(
        kernel,
        out_shape=jax.ShapeDtypeStruct((M, out_features), x.dtype),
        grid_spec=pltpu.PrefetchScalarGridSpec(
            num_scalar_prefetch=0,
            grid=grid,
            in_specs=[
                pl.BlockSpec((tm_eff, Kp), lambda i, j: (i, 0)),
                w_spec,
                b_spec,
            ],
            out_specs=pl.BlockSpec((tm_eff, tn), lambda i, j: (i, j)),
        ),
        compiler_params=pltpu.CompilerParams(
            dimension_semantics=("parallel", "parallel"),
            vmem_limit_bytes=vmem_limit),
    )(x2d, w_in, b_in)

    return out2d.reshape(batch, frames, out_features)


def feature_projection(x, gamma, beta, weight, bias, *, tm=1024):
    """One-shot convenience wrapper (folds params per call).

    In production, call fold_feature_projection_params once at load time and
    reuse its outputs with feature_projection_folded (bf16 weights preferred
    for the native MXU path, esp. on v5e).
    """
    w_folded, b_folded = fold_feature_projection_params(gamma, beta, weight, bias)
    return feature_projection_folded(x, w_folded, b_folded, tm=tm)


def _reference(x, gamma, beta, weight, bias):
    x32 = x.astype(jnp.float32)
    mu = jnp.mean(x32, axis=-1, keepdims=True)
    var = jnp.mean((x32 - mu) ** 2, axis=-1, keepdims=True)
    xn = (x32 - mu) / jnp.sqrt(var + LN_EPS)
    y = xn * gamma.astype(jnp.float32) + beta.astype(jnp.float32)
    return y @ weight.astype(jnp.float32) + bias.astype(jnp.float32)


if __name__ == "__main__":
    # --- Case 1: small, module-consistent shapes ----------------------------
    # frames=7 -> ragged (partial) row tile; in_features=32 -> K-pad + mask
    # path; out_features=64 -> full-dim (non-128) output block.
    batch, frames, in_features, out_features = 2, 7, 32, 64

    key = jax.random.PRNGKey(0)
    kx, kg, kb, kw, kbias = jax.random.split(key, 5)

    x = jax.random.normal(kx, (batch, frames, in_features), dtype=jnp.float32)
    gamma = 1.0 + 0.01 * jax.random.normal(kg, (in_features,), jnp.float32)
    beta = 0.01 * jax.random.normal(kb, (in_features,), jnp.float32)
    # nn.Linear weight is (out_features, in_features); we store the transpose.
    weight = (jax.random.normal(kw, (in_features, out_features), jnp.float32)
              / jnp.sqrt(in_features))
    bias = 0.01 * jax.random.normal(kbias, (out_features,), jnp.float32)

    # f32 path (tight check).  Params folded once, then reused.
    w_f, b_f = fold_feature_projection_params(gamma, beta, weight, bias)
    out = feature_projection_folded(x, w_f, b_f)
    jax.block_until_ready(out)
    ref = _reference(x, gamma, beta, weight, bias)
    assert out.shape == (batch, frames, out_features)
    assert jnp.allclose(out, ref, atol=2e-4, rtol=2e-4), float(
        jnp.max(jnp.abs(out - ref)))

    # bf16 weights/activations -> native MXU path (loose check).
    xb = x.astype(jnp.bfloat16)
    wb = weight.astype(jnp.bfloat16)
    w_fb, b_fb = fold_feature_projection_params(
        gamma.astype(jnp.bfloat16), beta.astype(jnp.bfloat16), wb,
        bias.astype(jnp.bfloat16))
    out_b = feature_projection_folded(xb, w_fb, b_fb)
    jax.block_until_ready(out_b)
    ref_b = _reference(xb.astype(jnp.float32), gamma, beta,
                       wb.astype(jnp.float32), bias)
    assert out_b.shape == (batch, frames, out_features)
    assert jnp.allclose(out_b.astype(jnp.float32), ref_b, atol=1e-1, rtol=1e-1)

    # --- Case 2: lane-aligned features, multiple row tiles ------------------
    # in_features=256 -> no K pad / no mask branch; M=600 -> several row
    # tiles with a ragged last one (no host row padding, no output slice).
    b2, f2, k2, n2 = 2, 300, 256, 384
    key2 = jax.random.PRNGKey(1)
    kx2, kg2, kb2, kw2, kbias2 = jax.random.split(key2, 5)
    x2 = jax.random.normal(kx2, (b2, f2, k2), dtype=jnp.float32)
    gamma2 = 1.0 + 0.01 * jax.random.normal(kg2, (k2,), jnp.float32)
    beta2 = 0.01 * jax.random.normal(kb2, (k2,), jnp.float32)
    weight2 = jax.random.normal(kw2, (k2, n2), jnp.float32) / jnp.sqrt(k2)
    bias2 = 0.01 * jax.random.normal(kbias2, (n2,), jnp.float32)

    w_f2, b_f2 = fold_feature_projection_params(gamma2, beta2, weight2, bias2)
    out2 = feature_projection_folded(x2, w_f2, b_f2)
    jax.block_until_ready(out2)
    ref2 = _reference(x2, gamma2, beta2, weight2, bias2)
    assert out2.shape == (b2, f2, n2)
    assert jnp.allclose(out2, ref2, atol=3e-4, rtol=3e-4), float(
        jnp.max(jnp.abs(out2 - ref2)))

    print("KERNEL_OK")
</pallas_src>

<mosaic_0001>
module attributes {stable_mosaic.version = 11 : i64} {
  func.func @_feature_projection_kernel(%arg0: i32, %arg1: i32, %arg2: memref<16x128xf32, #tpu.memory_space<vmem>>, %arg3: memref<128x64xf32, #tpu.memory_space<vmem>>, %arg4: memref<1x64xf32, #tpu.memory_space<vmem>>, %arg5: memref<16x64xf32, #tpu.memory_space<vmem>>) attributes {dimension_semantics = [#tpu.dimension_semantics<parallel>, #tpu.dimension_semantics<parallel>], iteration_bounds = array<i64: 1, 1>, scalar_prefetch = 0 : i64, scratch_operands = 0 : i64, tpu.core_type = #tpu.core_type<tc>, window_params = [{transform_indices = @transform_0, window_bounds = array<i64: 16, 128>}, {pipeline_mode = #tpu.pipeline_mode<synchronous>, transform_indices = @transform_1, window_bounds = array<i64: 128, 64>}, {pipeline_mode = #tpu.pipeline_mode<synchronous>, transform_indices = @transform_2, window_bounds = array<i64: 1, 64>}, {transform_indices = @transform_3, window_bounds = array<i64: 16, 64>}]} {
    %c0 = arith.constant 0 : index
    %c0_0 = arith.constant 0 : index
    %0 = vector.load %arg2[%c0, %c0_0] : memref<16x128xf32, #tpu.memory_space<vmem>>, vector<16x128xf32>
    %cst = arith.constant dense<0.000000e+00> : vector<16xf32>
    %1 = vector.multi_reduction <add>, %0, %cst [1] : vector<16x128xf32> to vector<16xf32>
    %2 = vector.shape_cast %1 : vector<16xf32> to vector<16x1xf32>
    %cst_1 = arith.constant 3.125000e-02 : f32
    %3 = vector.broadcast %cst_1 : f32 to vector<16x1xf32>
    %4 = arith.mulf %2, %3 : vector<16x1xf32>
    %5 = vector.broadcast %4 : vector<16x1xf32> to vector<16x128xf32>
    %6 = arith.subf %0, %5 : vector<16x128xf32>
    %7 = tpu.iota {dimensions = array<i32: 1>} : vector<16x128xi32>
    %c32_i32 = arith.constant 32 : i32
    %8 = vector.broadcast %c32_i32 : i32 to vector<16x128xi32>
    %9 = arith.cmpi slt, %7, %8 : vector<16x128xi32>
    %cst_2 = arith.constant 0.000000e+00 : f32
    %10 = vector.broadcast %cst_2 : f32 to vector<16x128xf32>
    %11 = arith.select %9, %6, %10 : vector<16x128xi1>, vector<16x128xf32>
    %12 = arith.mulf %11, %11 : vector<16x128xf32>
    %cst_3 = arith.constant dense<0.000000e+00> : vector<16xf32>
    %13 = vector.multi_reduction <add>, %12, %cst_3 [1] : vector<16x128xf32> to vector<16xf32>
    %14 = vector.shape_cast %13 : vector<16xf32> to vector<16x1xf32>
    %cst_4 = arith.constant 3.125000e-02 : f32
    %15 = vector.broadcast %cst_4 : f32 to vector<16x1xf32>
    %16 = arith.mulf %14, %15 : vector<16x1xf32>
    %cst_5 = arith.constant 9.99999974E-6 : f32
    %17 = vector.broadcast %cst_5 : f32 to vector<16x1xf32>
    %18 = arith.addf %16, %17 : vector<16x1xf32>
    %19 = math.rsqrt %18 : vector<16x1xf32>
    %20 = vector.broadcast %19 : vector<16x1xf32> to vector<16x128xf32>
    %21 = arith.mulf %11, %20 : vector<16x128xf32>
    %c0_6 = arith.constant 0 : index
    %c0_7 = arith.constant 0 : index
    %22 = vector.load %arg3[%c0_6, %c0_7] : memref<128x64xf32, #tpu.memory_space<vmem>>, vector<128x64xf32>
    %cst_8 = arith.constant dense<0.000000e+00> : vector<16x64xf32>
    %23 = tpu.matmul %21, %22, %cst_8 {dimension_numbers = #tpu.dot_dimension_numbers<[1], [0], [0], [1], [0, 0, 1, 1], [], []>} : vector<16x128xf32>, vector<128x64xf32>, vector<16x64xf32> -> vector<16x64xf32>
    %c0_9 = arith.constant 0 : index
    %c0_10 = arith.constant 0 : index
    %24 = vector.load %arg4[%c0_9, %c0_10] : memref<1x64xf32, #tpu.memory_space<vmem>>, vector<1x64xf32>
    %25 = vector.broadcast %24 : vector<1x64xf32> to vector<16x64xf32>
    %26 = arith.addf %23, %25 : vector<16x64xf32>
    %c0_11 = arith.constant 0 : index
    %c0_12 = arith.constant 0 : index
    %27 = vector.load %arg5[%c0_11, %c0_12] : memref<16x64xf32, #tpu.memory_space<vmem>>, vector<16x64xf32>
    tpu.vector_store %arg5[%c0_11, %c0_12], %26 {strides = array<i32>} : memref<16x64xf32, #tpu.memory_space<vmem>>, vector<16x64xf32>,
    return
  }
  func.func @transform_0(%arg0: i32, %arg1: i32) -> (i32, i32) {
    %c0_i32 = arith.constant 0 : i32
    %c0_i32_0 = arith.constant 0 : i32
    return %arg0, %c0_i32 : i32, i32
  }
  func.func @transform_1(%arg0: i32, %arg1: i32) -> (i32, i32) {
    %c0_i32 = arith.constant 0 : i32
    %c0_i32_0 = arith.constant 0 : i32
    %c0_i32_1 = arith.constant 0 : i32
    return %c0_i32, %c0_i32_0 : i32, i32
  }
  func.func @transform_2(%arg0: i32, %arg1: i32) -> (i32, i32) {
    %c0_i32 = arith.constant 0 : i32
    %c0_i32_0 = arith.constant 0 : i32
    %c0_i32_1 = arith.constant 0 : i32
    return %c0_i32, %c0_i32_0 : i32, i32
  }
  func.func @transform_3(%arg0: i32, %arg1: i32) -> (i32, i32) {
    %c0_i32 = arith.constant 0 : i32
    return %arg0, %arg1 : i32, i32
  }
}

</mosaic_0001>

<llo_original>
// kernel: tpu_custom_call.1
$region0: #{tpu_custom_call.1}
  #allocation0 [shape = 'u32[]', space=smem, size = 0x4, offset = 0x4, fixed_abs, tag = 'smem constant byte address 0x4 - core index']
  #allocation1 [shape = 'u32[144,128]{1,0:T(1,128)}', space=vmem, size = 0x12000, scoped, tag = 'internal scratch']
  %s0 = inlined_call_operand.vmem [shape: f32[14,128], index: 0, kind: input, shape index: {}]
  %s1 = inlined_call_operand.vmem [shape: f32[128,64], index: 1, kind: input, shape index: {}]
  %s2 = inlined_call_operand.vmem [shape: f32[1,64], index: 2, kind: input, shape index: {}]
  %s3 = inlined_call_operand.hbm [shape: f32[14,64], index: 3, kind: output, shape index: {}]
  %s4 = sld [smem:[#allocation0]]
  $region22: #{tpu_custom_call.1} parent=0
    _
  %s6 = ssub.s32 1, %s4
  %s7 = scalar_select 0, %s6, %s4
  $region1: #{tpu_custom_call.1} parent=0
    #allocation2 [shape = 'u8[8192]{0}', space=vmem, size = 0x2000, scoped, tag = 'output window, operand 0, single buffered']
    #allocation3 [shape = 's32[1]{0}', space=sflag, size = 0x4, scoped, tag = 'scoped memory for tpu_custom_call.1']
    %8 = vsyncpa [#allocation3], 0
    // Predicated region
    $region2: #{tpu_custom_call.1} parent=1 // pred_check
      _
    $region3: #{tpu_custom_call.1} parent=1 // pred_check_branch
      %10 = sbr.rel (0) target = $region5
    $region4: #{tpu_custom_call.1} parent=1 // pred_region
      _
    $region5: #{tpu_custom_call.1} parent=1 // pred_fallthru
      _
    // Predicated region
    $region6: #{tpu_custom_call.1} parent=1 // pred_check
      _
    $region7: #{tpu_custom_call.1} parent=1 // pred_check_branch
      %12 = sbr.rel (0) target = $region9
    $region8: #{tpu_custom_call.1} parent=1 // pred_region
      _
    $region9: #{tpu_custom_call.1} parent=1 // pred_fallthru
      _
    // Predicated region
    $region10: #{tpu_custom_call.1} parent=1 // pred_check
      _
    $region11: #{tpu_custom_call.1} parent=1 // pred_check_branch
      %14 = sbr.rel (0) target = $region13
    $region12: #{tpu_custom_call.1} parent=1 // pred_region
      _
    $region13: #{tpu_custom_call.1} parent=1 // pred_fallthru
      _
    %v15 = vld [vmem:[%s0] sm:$0xff]
    %v16 = vld [vmem:[%s0 + $0x8] sm:$0xff]
    %17 = vadd.xlane.f32.xlu0 %v15
    %v18 = vpop.xlane.xlu0 %17
    %19 = vadd.xlane.f32.xlu0 %v16
    %v20 = vpop.xlane.xlu0 %19
    %v21 = vmul.f32 %v18, 0.03125
    %v22 = vmul.f32 %v20, 0.03125
    %v23 = vsub.f32 %v15, %v21
    %v24 = vsub.f32 %v16, %v22
    %v25 = vlaneseq
    %v26 = vand.u32 %v25, 127
    %vm27 = vcmp.lt.s32.totalorder %v26, 32
    %v28 = vsel %vm27, %v23, 0.0
    %v29 = vsel %vm27, %v24, 0.0
    %v30 = vmul.f32 %v28, %v28
    %v31 = vmul.f32 %v29, %v29
    %32 = vadd.xlane.f32.xlu0 %v30
    %v33 = vpop.xlane.xlu0 %32
    %34 = vadd.xlane.f32.xlu0 %v31
    %v35 = vpop.xlane.xlu0 %34
    %v36 = vmul.f32 %v33, 0.03125
    %v37 = vmul.f32 %v35, 0.03125
    %v38 = vadd.f32 %v36, 1e-05
    %v39 = vadd.f32 %v37, 1e-05
    %v40 = vrsqrt.pop %v38
    %v41 = vrsqrt.pop %v39
    %v42 = vmul.f32 %v28, %v40
    %v43 = vmul.f32 %v29, %v41
    %v44 = vld [vmem:[%s1] sm:$0xff]
    %v45 = vld [vmem:[%s1 + $0x8] sm:$0xff]
    %v46 = vld [vmem:[%s1 + $0x10] sm:$0xff]
    %v47 = vld [vmem:[%s1 + $0x18] sm:$0xff]
    %v48 = vld [vmem:[%s1 + $0x20] sm:$0xff]
    %v49 = vld [vmem:[%s1 + $0x28] sm:$0xff]
    %v50 = vld [vmem:[%s1 + $0x30] sm:$0xff]
    %v51 = vld [vmem:[%s1 + $0x38] sm:$0xff]
    %v52 = vld [vmem:[%s1 + $0x40] sm:$0xff]
    %v53 = vld [vmem:[%s1 + $0x48] sm:$0xff]
    %v54 = vld [vmem:[%s1 + $0x50] sm:$0xff]
    %v55 = vld [vmem:[%s1 + $0x58] sm:$0xff]
    %v56 = vld [vmem:[%s1 + $0x60] sm:$0xff]
    %v57 = vld [vmem:[%s1 + $0x68] sm:$0xff]
    %v58 = vld [vmem:[%s1 + $0x70] sm:$0xff]
    %v59 = vld [vmem:[%s1 + $0x78] sm:$0xff]
    %v60 = vld [vmem:[%s2] sm:$0x1]
    %v62 = vlaneseq
    %v63 = vshrl.u32 %v62, 7
    %v64 = vsub.s32 0, %v63
    %v65 = vrot.slane %v60, %v64
    %67 = vmatprep.subr.mxu0 0.0
    %68 = vmatpush1.msra.mxu0 %v59
    %69 = vmatprep.subr.mxu0 0.0
    %70 = vmatpush1.msra.mxu0 %v58
    %71 = vmatprep.subr.mxu0 0.0
    %72 = vmatpush1.msra.mxu0 %v57
    %73 = vmatprep.subr.mxu0 0.0
    %74 = vmatpush1.msra.mxu0 %v56
    %75 = vmatprep.subr.mxu0 0.0
    %76 = vmatpush1.msra.mxu0 %v55
    %77 = vmatprep.subr.mxu0 0.0
    %78 = vmatpush1.msra.mxu0 %v54
    %79 = vmatprep.subr.mxu0 0.0
    %80 = vmatpush1.msra.mxu0 %v53
    %81 = vmatprep.subr.mxu0 0.0
    %82 = vmatpush1.msra.mxu0 %v52
    %83 = vmatprep.subr.mxu0 0.0
    %84 = vmatpush1.msra.mxu0 %v51
    %85 = vmatprep.subr.mxu0 0.0
    %86 = vmatpush1.msra.mxu0 %v50
    %87 = vmatprep.subr.mxu0 0.0
    %88 = vmatpush1.msra.mxu0 %v49
    %89 = vmatprep.subr.mxu0 0.0
    %90 = vmatpush1.msra.mxu0 %v48
    %91 = vmatprep.subr.mxu0 0.0
    %92 = vmatpush1.msra.mxu0 %v47
    %93 = vmatprep.subr.mxu0 0.0
    %94 = vmatpush1.msra.mxu0 %v46
    %95 = vmatprep.subr.mxu0 0.0
    %96 = vmatpush1.msra.mxu0 %v45
    %97 = vmatprep.subr.mxu0 0.0
    %98 = vmatpush1.msra.mxu0 %v44
    %99 = vmatprep.subr.mxu0 0.0
    %100 = vmatpush2.msra.mxu0 0.0
    %101 = vmatprep.subr.mxu0 0.0
    %102 = vmatpush2.msra.mxu0 0.0
    %103 = vmatprep.subr.mxu0 0.0
    %104 = vmatpush2.msra.mxu0 0.0
    %105 = vmatprep.subr.mxu0 0.0
    %106 = vmatpush2.msra.mxu0 0.0
    %107 = vmatprep.subr.mxu0 0.0
    %108 = vmatpush2.msra.mxu0 0.0
    %109 = vmatprep.subr.mxu0 0.0
    %110 = vmatpush2.msra.mxu0 0.0
    %111 = vmatprep.subr.mxu0 0.0
    %112 = vmatpush2.msra.mxu0 0.0
    %113 = vmatprep.subr.mxu0 0.0
    %114 = vmatpush2.msra.mxu0 0.0
    %115 = vmatprep.subr.mxu0 0.0
    %116 = vmatpush2.msra.mxu0 0.0
    %117 = vmatprep.subr.mxu0 0.0
    %118 = vmatpush2.msra.mxu0 0.0
    %119 = vmatprep.subr.mxu0 0.0
    %120 = vmatpush2.msra.mxu0 0.0
    %121 = vmatprep.subr.mxu0 0.0
    %122 = vmatpush2.msra.mxu0 0.0
    %123 = vmatprep.subr.mxu0 0.0
    %124 = vmatpush2.msra.mxu0 0.0
    %125 = vmatprep.subr.mxu0 0.0
    %126 = vmatpush2.msra.mxu0 0.0
    %127 = vmatprep.subr.mxu0 0.0
    %128 = vmatpush2.msra.mxu0 0.0
    %129 = vmatprep.subr.mxu0 0.0
    %130 = vmatpush2.msra.mxu0 0.0
    %131 = vmatprep.mubr.f32.mxu0 0.0
    %132 = vmatmul.mubr.f32.gmra.mxu0 %v42
    %v133 = vpop.f32.mrf.mxu0
    %v134 = vadd.f32 %v65, %v133
    %v135 = vpop.f32.mrf.mxu0
    %136 = vmatprep.mubr.f32.mxu0 0.0
    %137 = vmatmul.mubr.f32.gmra.mxu0 %v43
    %v138 = vpop.f32.mrf.mxu0
    %v139 = vadd.f32 %v65, %v138
    %v140 = vpop.f32.mrf.mxu0
    %141 = vdwg.mxu0
    %vm142 = vcmask 523264
    %143 = vst.msk [vmem:[#allocation2] sm:$0xff] %vm142, %v134
    %144 = vst.msk [vmem:[#allocation2 + $0x8] sm:$0xff] %vm142, %v139
    // Predicated region
    $region14: #{tpu_custom_call.1} parent=1 // pred_check
      _
    $region15: #{tpu_custom_call.1} parent=1 // pred_check_branch
      %146 = sbr.rel (0) target = $region17
    $region16: #{tpu_custom_call.1} parent=1 // pred_region
      %s148 = ssub.s32 256, 256
      %149 = vsyncadd [#allocation3], %s148
      %s150 = sshll.u32 [#allocation2], 4
      %s151 = int_to_ptr.vmem [resolvable:$true] %s150
      %156 = dma.vmem_to_hbm [thread:$0]  %s151, 256, %s3, [#allocation3], 128, 128, 8
    $region17: #{tpu_custom_call.1} parent=1 // pred_fallthru
      _
    // Predicated region
    $region18: #{tpu_custom_call.1} parent=1 // pred_check
      _
    $region19: #{tpu_custom_call.1} parent=1 // pred_check_branch
      %158 = sbr.rel (0) target = $region21
    $region20: #{tpu_custom_call.1} parent=1 // pred_region
      %159 = dma.done [#allocation3], 256
    $region21: #{tpu_custom_call.1} parent=1 // pred_fallthru
      _
    %160 = vsyncpa [#allocation3], 1

</llo_original>
